<compile_context>
chip_gen: v7x
topology: tpu7x:2x2x1
jax: 0.10.0
libtpu: 0.0.40
codegen_flags: <defaults>
</compile_context>

<pallas_src>
import jax
import jax.numpy as jnp
from jax.experimental import pallas as pl
from jax.experimental.pallas import tpu as pltpu

LANES = 128
TARGET_BLOCK_BYTES = 4 * 1024 * 1024    # ~4 MiB per block buffer, dtype-independent
VMEM_LIMIT_BYTES = 32 * 1024 * 1024     # in+out double-buffered 4 MiB blocks + headroom
MIN_GRID_STEPS = 8                      # keep pipeline busy / feed both v7x TCs


def _elliptic_gaussian_kernel(coef_ref, x_ref, o_ref):
    # coef_ref: SMEM f32[2] = (c4, c6) with
    #   c4 = (1 + 4m) / 24,  c6 = -(1 + 44m + 16m^2) / 720
    x = x_ref[...].astype(jnp.float32)   # single upcast (no-op for f32 inputs)
    u2 = x * x
    u4 = u2 * u2
    u6 = u4 * u2
    cn = 1.0 - 0.5 * u2 + coef_ref[0] * u4 + coef_ref[1] * u6
    cn = jnp.clip(cn, -1.0, 1.0)
    o_ref[...] = (x * jnp.exp(-cn)).astype(o_ref.dtype)


def _coefficients(m_param: jax.Array) -> jax.Array:
    m = jnp.clip(m_param.astype(jnp.float32).reshape(-1)[0], 0.0, 1.0)
    c4 = (1.0 + 4.0 * m) / 24.0
    c6 = -(1.0 + 44.0 * m + 16.0 * m * m) / 720.0
    return jnp.stack([c4, c6])


def _apply_jnp(x: jax.Array, coef: jax.Array) -> jax.Array:
    """Same math as the kernel body; used for tiny ragged tails / sub-tile inputs."""
    xf = x.astype(jnp.float32)
    u2 = xf * xf
    u4 = u2 * u2
    u6 = u4 * u2
    cn = jnp.clip(1.0 - 0.5 * u2 + coef[0] * u4 + coef[1] * u6, -1.0, 1.0)
    return (xf * jnp.exp(-cn)).astype(x.dtype)


def elliptic_gaussian_activation(x: jax.Array, m_param: jax.Array) -> jax.Array:
    """f(x) = x * exp(-cn(x, clamp(m_param, 0, 1))) applied elementwise."""
    orig_shape = x.shape
    orig_dtype = x.dtype

    coef = _coefficients(m_param)

    flat = x.reshape(-1)
    n = flat.shape[0]
    if n == 0:                                   # robustness: empty input
        return x

    # Packed-dtype minimum sublane multiple: f32 -> 8, bf16 -> 16, int8/fp8 -> 32.
    itemsize = jnp.dtype(orig_dtype).itemsize
    sub = max(8, 32 // max(itemsize, 1))
    chunk = sub * LANES

    n_main = (n // chunk) * chunk
    if n_main == 0:
        # Whole input smaller than one (sub, 128) tile: not worth a kernel launch.
        return _apply_jnp(flat, coef).reshape(orig_shape)

    main = flat if n_main == n else flat[:n_main]
    rows = n_main // LANES                       # multiple of `sub`
    slab = main.reshape(rows, LANES)

    # Byte-based block sizing: ~TARGET_BLOCK_BYTES per buffer, rounded to `sub` rows.
    br = max(sub, (TARGET_BLOCK_BYTES // (LANES * itemsize)) // sub * sub)
    # Cap so the grid has >= MIN_GRID_STEPS steps whenever rows permits
    # (restores DMA/compute overlap and lets v7x shard the axis across both TCs).
    br_cap = max(sub, (rows // MIN_GRID_STEPS) // sub * sub)
    br = min(br, br_cap, rows)
    grid = (pl.cdiv(rows, br),)

    out = pl.pallas_call(
        _elliptic_gaussian_kernel,
        out_shape=jax.ShapeDtypeStruct((rows, LANES), orig_dtype),
        grid_spec=pltpu.PrefetchScalarGridSpec(
            num_scalar_prefetch=1,
            grid=grid,
            in_specs=[pl.BlockSpec((br, LANES), lambda i, _coef: (i, 0))],
            out_specs=pl.BlockSpec((br, LANES), lambda i, _coef: (i, 0)),
        ),
        compiler_params=pltpu.CompilerParams(
            dimension_semantics=("parallel",),
            vmem_limit_bytes=VMEM_LIMIT_BYTES,
        ),
    )(coef, slab)

    main_out = out.reshape(-1)
    if n_main == n:
        return main_out.reshape(orig_shape)
    # Tiny ragged tail (< sub*128 elements): plain jnp, no full-array pad/slice copies.
    tail_out = _apply_jnp(flat[n_main:], coef)
    return jnp.concatenate([main_out, tail_out]).reshape(orig_shape)


def elliptic_gaussian_activation_ref(x: jax.Array, m_param: jax.Array) -> jax.Array:
    """Pure-JAX reference of the PyTorch forward."""
    m = jnp.clip(m_param.astype(jnp.float32).reshape(-1)[0], 0.0, 1.0)
    u2 = jnp.square(x)
    u4 = u2 * u2
    u6 = u4 * u2
    cn = (1.0 - u2 / 2.0
          + u4 / 24.0 * (1.0 + 4.0 * m)
          - (u6 / 720.0) * (1.0 + 44.0 * m + 16.0 * jnp.square(m)))
    cn = jnp.clip(cn, -1.0, 1.0)
    return x * jnp.exp(-cn)


if __name__ == "__main__":
    key = jax.random.PRNGKey(0)
    # NCHW, matching a typical conv-activation usage of the module.
    x = jax.random.normal(key, (2, 4, 16, 16), dtype=jnp.float32)
    m_param = jnp.full((1,), 0.5, dtype=jnp.float32)  # module's nn.Parameter init

    y = elliptic_gaussian_activation(x, m_param)
    y = jax.block_until_ready(y)

    y_ref = elliptic_gaussian_activation_ref(x, m_param)
    assert y.shape == x.shape and y.dtype == x.dtype
    assert jnp.allclose(y, y_ref, atol=1e-5, rtol=1e-5), "mismatch vs reference"

    # Ragged-shape sanity check (tail path) on a small odd-sized tensor.
    x2 = jax.random.normal(jax.random.PRNGKey(1), (3, 5, 7, 11), dtype=jnp.float32)
    y2 = jax.block_until_ready(elliptic_gaussian_activation(x2, m_param))
    assert jnp.allclose(y2, elliptic_gaussian_activation_ref(x2, m_param),
                        atol=1e-5, rtol=1e-5), "mismatch vs reference (ragged)"

    print("KERNEL_OK")
</pallas_src>

<mosaic_0001>
module attributes {stable_mosaic.version = 11 : i64} {
  func.func @_elliptic_gaussian_kernel(%arg0: i32, %arg1: memref<2xf32, #tpu.memory_space<smem>>, %arg2: memref<8x128xf32, #tpu.memory_space<vmem>>, %arg3: memref<8x128xf32, #tpu.memory_space<vmem>>) attributes {dimension_semantics = [#tpu.dimension_semantics<parallel>], iteration_bounds = array<i64: 2>, scalar_prefetch = 1 : i64, scratch_operands = 0 : i64, tpu.core_type = #tpu.core_type<tc>, window_params = [{transform_indices = @transform_0, window_bounds = array<i64: 8, 128>}, {transform_indices = @transform_1, window_bounds = array<i64: 8, 128>}]} {
    %c0 = arith.constant 0 : index
    %c0_0 = arith.constant 0 : index
    %0 = vector.load %arg2[%c0, %c0_0] : memref<8x128xf32, #tpu.memory_space<vmem>>, vector<8x128xf32>
    %1 = arith.mulf %0, %0 : vector<8x128xf32>
    %2 = arith.mulf %1, %1 : vector<8x128xf32>
    %3 = arith.mulf %2, %1 : vector<8x128xf32>
    %cst = arith.constant 5.000000e-01 : f32
    %4 = vector.broadcast %cst : f32 to vector<8x128xf32>
    %5 = arith.mulf %4, %1 : vector<8x128xf32>
    %cst_1 = arith.constant 1.000000e+00 : f32
    %6 = vector.broadcast %cst_1 : f32 to vector<8x128xf32>
    %7 = arith.subf %6, %5 : vector<8x128xf32>
    %c0_2 = arith.constant 0 : index
    %8 = memref.load %arg1[%c0_2] : memref<2xf32, #tpu.memory_space<smem>>
    %9 = vector.broadcast %8 : f32 to vector<8x128xf32>
    %10 = arith.mulf %9, %2 : vector<8x128xf32>
    %11 = arith.addf %7, %10 : vector<8x128xf32>
    %c1 = arith.constant 1 : index
    %12 = memref.load %arg1[%c1] : memref<2xf32, #tpu.memory_space<smem>>
    %13 = vector.broadcast %12 : f32 to vector<8x128xf32>
    %14 = arith.mulf %13, %3 : vector<8x128xf32>
    %15 = arith.addf %11, %14 : vector<8x128xf32>
    %cst_3 = arith.constant -1.000000e+00 : f32
    %cst_4 = arith.constant 1.000000e+00 : f32
    %16 = vector.broadcast %cst_3 : f32 to vector<8x128xf32>
    %17 = arith.maximumf %16, %15 : vector<8x128xf32>
    %18 = vector.broadcast %cst_4 : f32 to vector<8x128xf32>
    %19 = arith.minimumf %18, %17 : vector<8x128xf32>
    %cst_5 = arith.constant 0.000000e+00 : f32
    %20 = vector.broadcast %cst_5 : f32 to vector<8x128xf32>
    %21 = arith.subf %20, %19 : vector<8x128xf32>
    %22 = math.exp %21 : vector<8x128xf32>
    %23 = arith.mulf %0, %22 : vector<8x128xf32>
    %c0_6 = arith.constant 0 : index
    %c0_7 = arith.constant 0 : index
    %24 = vector.load %arg3[%c0_6, %c0_7] : memref<8x128xf32, #tpu.memory_space<vmem>>, vector<8x128xf32>
    tpu.vector_store %arg3[%c0_6, %c0_7], %23 {strides = array<i32>} : memref<8x128xf32, #tpu.memory_space<vmem>>, vector<8x128xf32>,
    return
  }
  func.func @transform_0(%arg0: i32, %arg1: memref<2xf32, #tpu.memory_space<smem>>) -> (i32, i32) {
    %c0_i32 = arith.constant 0 : i32
    %c0_i32_0 = arith.constant 0 : i32
    return %arg0, %c0_i32 : i32, i32
  }
  func.func @transform_1(%arg0: i32, %arg1: memref<2xf32, #tpu.memory_space<smem>>) -> (i32, i32) {
    %c0_i32 = arith.constant 0 : i32
    %c0_i32_0 = arith.constant 0 : i32
    return %arg0, %c0_i32 : i32, i32
  }
}

</mosaic_0001>

<llo_original>
// kernel: tpu_custom_call.1
$region0: #{tpu_custom_call.1}
  #allocation0 [shape = 'u32[]', space=smem, size = 0x4, offset = 0x4, fixed_abs, tag = 'smem constant byte address 0x4 - core index']
  #allocation1 [shape = 'u32[144,128]{1,0:T(1,128)}', space=vmem, size = 0x12000, scoped, tag = 'internal scratch']
  #allocation2 [shape = 's32[1]{0}', space=sflag, size = 0x4, scoped, tag = 'scoped memory for tpu_custom_call.1']
  #allocation3 [shape = 'u8[512]{0}', space=smem, size = 0x200, scoped, tag = 'prefetched SMEM operand 0']
  %s0 = inlined_call_operand.hbm [shape: f32[2], index: 0, kind: input, shape index: {}]
  %s1 = inlined_call_operand.hbm [shape: f32[16,128], index: 1, kind: input, shape index: {}]
  %s2 = inlined_call_operand.hbm [shape: f32[16,128], index: 2, kind: output, shape index: {}]
  %s3 = sld [smem:[#allocation0]]
  $region41: #{tpu_custom_call.1} parent=0
    _
  %s5 = ssub.s32 1, %s3
  %s6 = scalar_select 0, %s5, %s3
  %8 = dma.hbm_to_smem %s0, 16, [#allocation3], [#allocation2]
  %9 = dma.done [#allocation2], 16
  %10 = sfence
  $region1: #{tpu_custom_call.1} parent=0
    #allocation4 [shape = 'u8[8192]{0}', space=vmem, size = 0x2000, scoped, tag = 'input window, operand 1']
    #allocation5 [shape = 's32[2]{0}', space=sflag, size = 0x8, scoped, tag = 'scoped memory for tpu_custom_call.1']
    #allocation6 [shape = 's32[2]{0}', space=sflag, size = 0x8, scoped, tag = 'scoped memory for tpu_custom_call.1']
    #allocation7 [shape = 'u8[8192]{0}', space=vmem, size = 0x2000, scoped, tag = 'output window, operand 0']
    %11 = vsyncpa [#allocation5], 0
    %s12 = scalar_lea.sflag [#allocation5], 1
    %13 = vsyncpa %s12, 0
    %14 = vsyncpa [#allocation6], 0
    %s15 = scalar_lea.sflag [#allocation6], 1
    %16 = vsyncpa %s15, 0
    loop: start=0, step=1, limit=4
    $region2: #{tpu_custom_call.1} parent=1 // loop_pre_header
      _
    $region3: #{tpu_custom_call.1} parent=1 // loop_header
      %s18 = sphi 0, %s22
      %p19 = scmp.ge.s32.totalorder %s18, 4
      %s28 = sphi 0, %s30
      %s31 = sphi 0, %s28
      %s32 = sphi 0, %s31
      %s48 = sphi 0, %s32
      %s54 = sphi 0, %s56
      %s57 = sphi 0, %s54
      %s58 = sphi 0, %s57
      %s74 = sphi 0, %s58
    $region4: #{tpu_custom_call.1} parent=1 // loop_header_branch
      %21 = sbr.rel (%p19) target = $region8
    $region5: #{tpu_custom_call.1} parent=1 // loop_body
      %s23 = ssub.s32 %s18, 1
      %s24 = ssub.s32 %s18, 2
      %s25 = sadd.s32 %s18, 1
      %s26 = ssub.s32 %s18, %s25
      %p27 = scmp.eq.s32.totalorder %s26, 0
      %s29 = sadd.s32 %s28, 1
      %s30 = scalar_select %p27, %s28, %s29
      %p33 = pneg %p27
      %p34 = scmp.eq.s32.totalorder %s18, 1
      %p35 = por %p33, %p34
      %p36 = scmp.ne.s32.totalorder %s28, %s31
      %p37 = scmp.eq.s32.totalorder %s18, 0
      %p38 = por %p36, %p37
      %p39 = scmp.ne.s32.totalorder %s28, %s31
      %p40 = scmp.eq.s32.totalorder %s23, 1
      %p41 = por %p39, %p40
      %p42 = scmp.ne.s32.totalorder %s31, %s32
      %p43 = scmp.eq.s32.totalorder %s23, 0
      %p44 = por %p42, %p43
      %p45 = scmp.ne.s32.totalorder %s31, %s32
      %p46 = scmp.eq.s32.totalorder %s24, 1
      %p47 = por %p45, %p46
      %p49 = scmp.ne.s32.totalorder %s32, %s48
      %p50 = scmp.eq.s32.totalorder %s24, 0
      %p51 = por %p49, %p50
      %s52 = ssub.s32 %s18, %s25
      %p53 = scmp.eq.s32.totalorder %s52, 0
      %s55 = sadd.s32 %s54, 1
      %s56 = scalar_select %p53, %s54, %s55
      %p59 = pneg %p53
      %p60 = scmp.eq.s32.totalorder %s18, 1
      %p61 = por %p59, %p60
      %p62 = scmp.ne.s32.totalorder %s54, %s57
      %p63 = scmp.eq.s32.totalorder %s18, 0
      %p64 = por %p62, %p63
      %p65 = scmp.ne.s32.totalorder %s54, %s57
      %p66 = scmp.eq.s32.totalorder %s23, 1
      %p67 = por %p65, %p66
      %p68 = scmp.ne.s32.totalorder %s57, %s58
      %p69 = scmp.eq.s32.totalorder %s23, 0
      %p70 = por %p68, %p69
      %p71 = scmp.ne.s32.totalorder %s57, %s58
      %p72 = scmp.eq.s32.totalorder %s24, 1
      %p73 = por %p71, %p72
      %p75 = scmp.ne.s32.totalorder %s58, %s74
      %p76 = scmp.eq.s32.totalorder %s24, 0
      %p77 = por %p75, %p76
      %p78 = scmp.le.s32.totalorder 1, %s18
      %p79 = scmp.lt.s32.totalorder %s18, 3
      %p80 = pnand %p78, %p79
      %p81 = pneg %p80
      // Predicated region
      $region9: #{tpu_custom_call.1} parent=5 // pred_check
        _
      $region10: #{tpu_custom_call.1} parent=5 // pred_check_branch
        %83 = sbr.rel (%p80) target = $region12
      $region11: #{tpu_custom_call.1} parent=5 // pred_region
        %s84 = ssub.s32 %s18, 1
      $region12: #{tpu_custom_call.1} parent=5 // pred_fallthru
        _
      %p85 = scmp.lt.s32.totalorder %s18, 2
      // Predicated region
      $region13: #{tpu_custom_call.1} parent=5 // pred_check
        %p86 = pneg %p85
      $region14: #{tpu_custom_call.1} parent=5 // pred_check_branch
        %88 = sbr.rel (%p86) target = $region16
      $region15: #{tpu_custom_call.1} parent=5 // pred_region
        // Predicated region
        $region17: #{tpu_custom_call.1} parent=15 // pred_check
          %p89 = pneg %p38
        $region18: #{tpu_custom_call.1} parent=15 // pred_check_branch
          %91 = sbr.rel (%p89) target = $region20
        $region19: #{tpu_custom_call.1} parent=15 // pred_region
          %s92 = sand.u32 %s28, 1
          %s93 = scalar_lea.sflag [#allocation5], %s92
          %s94 = sand.u32 %s28, 1
          %s95 = smul.addr %s94, 8
          %s96 = scalar_lea.vmem [#allocation4], %s95
          %s98 = ssub.s32 128, 128
          %99 = vsyncadd %s93, %s98
          %s100 = smul.addr %s18, 128
          %s101 = scalar_lea.hbm %s1, %s100
          %s103 = sshll.u32 %s96, 4
          %s104 = int_to_ptr.vmem [resolvable:$true] %s103
          %106 = dma.hbm_to_vmem [thread:$0]  %s101, 128, %s104, %s93
        $region20: #{tpu_custom_call.1} parent=15 // pred_fallthru
          _
      $region16: #{tpu_custom_call.1} parent=5 // pred_fallthru
        _
      %p107 = scmp.le.s32.totalorder 1, %s18
      %p108 = scmp.lt.s32.totalorder %s18, 3
      %p109 = pnand %p107, %p108
      %p110 = pneg %p109
      // Predicated region
      $region21: #{tpu_custom_call.1} parent=5 // pred_check
        _
      $region22: #{tpu_custom_call.1} parent=5 // pred_check_branch
        %112 = sbr.rel (%p109) target = $region24
      $region23: #{tpu_custom_call.1} parent=5 // pred_region
        %s113 = ssub.s32 %s18, 1
        %s114 = sand.u32 %s31, 1
        %s115 = scalar_lea.sflag [#allocation5], %s114
        %s116 = sand.u32 %s31, 1
        %s117 = smul.addr %s116, 8
        %s118 = scalar_lea.vmem [#allocation4], %s117
        // Predicated region
        $region25: #{tpu_custom_call.1} parent=23 // pred_check
          %p119 = pneg %p44
        $region26: #{tpu_custom_call.1} parent=23 // pred_check_branch
          %121 = sbr.rel (%p119) target = $region28
        $region27: #{tpu_custom_call.1} parent=23 // pred_region
          %122 = dma.done %s115, 128
        $region28: #{tpu_custom_call.1} parent=23 // pred_fallthru
          _
        %s123 = sand.u32 %s31, 1
        %s124 = scalar_lea.sflag [#allocation5], %s123
        %s125 = sand.u32 %s31, 1
        %s126 = smul.addr %s125, 8
        %s127 = scalar_lea.vmem [#allocation4], %s126
        %p128 = pneg %p44
        %p129 = pneg %p41
        %p130 = pneg %p70
        %p131 = pneg %p67
        %s132 = sand.u32 %s57, 1
        %s133 = scalar_lea.sflag [#allocation6], %s132
        %s134 = sand.u32 %s57, 1
        %s135 = smul.addr %s134, 8
        %s136 = scalar_lea.vmem [#allocation7], %s135
        %v137 = vld [vmem:[%s118] sm:$0xff]
        %v138 = vmul.f32 %v137, %v137
        %v139 = vmul.f32 %v138, %v138
        %v140 = vmul.f32 %v139, %v138
        %v141 = vmul.f32 %v138, 0.5
        %v142 = vsub.f32 1.0, %v141
        %s143 = sld [smem:[#allocation3]]
        %v144 = vstv %s143
        %v145 = vmul.f32 %v144, %v139
        %v146 = vadd.f32 %v142, %v145
        %s147 = sld [smem:[#allocation3 + $0x1]]
        %v148 = vstv %s147
        %v149 = vmul.f32 %v148, %v140
        %v150 = vadd.f32 %v146, %v149
        %v151 = vmax.f32 %v150, -1.0
        %v152 = vmin.f32 %v151, 1.0
        %v153 = vsub.f32 0.0, %v152
        %v154 = vmul.f32 %v153, 1.442695
        %v155 = vpow.pop %v154
        %v156 = vmul.f32 %v137, %v155
        %157 = vst [vmem:[%s136] sm:$0xff] %v156
        %s158 = sand.u32 %s57, 1
        %s159 = scalar_lea.sflag [#allocation6], %s158
        %s160 = sand.u32 %s57, 1
        %s161 = smul.addr %s160, 8
        %s162 = scalar_lea.vmem [#allocation7], %s161
        // Predicated region
        $region29: #{tpu_custom_call.1} parent=23 // pred_check
          %p163 = pneg %p67
        $region30: #{tpu_custom_call.1} parent=23 // pred_check_branch
          %165 = sbr.rel (%p163) target = $region32
        $region31: #{tpu_custom_call.1} parent=23 // pred_region
          %s167 = ssub.s32 128, 128
          %168 = vsyncadd %s159, %s167
          %s169 = smul.addr %s23, 128
          %s170 = scalar_lea.hbm %s2, %s169
          %s172 = sshll.u32 %s162, 4
          %s173 = int_to_ptr.vmem [resolvable:$true] %s172
          %175 = dma.vmem_to_hbm [thread:$0]  %s173, 128, %s170, %s159
        $region32: #{tpu_custom_call.1} parent=23 // pred_fallthru
          _
      $region24: #{tpu_custom_call.1} parent=5 // pred_fallthru
        _
      %p176 = scmp.le.s32.totalorder 2, %s18
      // Predicated region
      $region33: #{tpu_custom_call.1} parent=5 // pred_check
        %p177 = pneg %p176
      $region34: #{tpu_custom_call.1} parent=5 // pred_check_branch
        %179 = sbr.rel (%p177) target = $region36
      $region35: #{tpu_custom_call.1} parent=5 // pred_region
        %s180 = ssub.s32 %s18, 2
        // Predicated region
        $region37: #{tpu_custom_call.1} parent=35 // pred_check
          %p181 = pneg %p73
        $region38: #{tpu_custom_call.1} parent=35 // pred_check_branch
          %183 = sbr.rel (%p181) target = $region40
        $region39: #{tpu_custom_call.1} parent=35 // pred_region
          %s184 = sand.u32 %s58, 1
          %s185 = scalar_lea.sflag [#allocation6], %s184
          %s186 = sand.u32 %s58, 1
          %s187 = smul.addr %s186, 8
          %s188 = scalar_lea.vmem [#allocation7], %s187
          %189 = dma.done %s185, 128
        $region40: #{tpu_custom_call.1} parent=35 // pred_fallthru
          _
      $region36: #{tpu_custom_call.1} parent=5 // pred_fallthru
        _
    $region6: #{tpu_custom_call.1} parent=1 // loop_footer
      %s22 = sadd.s32 1, %s18
    $region7: #{tpu_custom_call.1} parent=1 // loop_footer_branch
      %17 = sbr.rel target = $region3
    $region8: #{tpu_custom_call.1} parent=1 // loop_exit
      _
    %190 = vsyncpa [#allocation5], 1
    %s191 = scalar_lea.sflag [#allocation5], 1
    %192 = vsyncpa %s191, 1
    %193 = vsyncpa [#allocation6], 1
    %s194 = scalar_lea.sflag [#allocation6], 1
    %195 = vsyncpa %s194, 1

</llo_original>
